<compile_context>
chip_gen: v5e
topology: v5e:2x2
jax: 0.10.0
libtpu: 0.0.40
codegen_flags: <defaults>
</compile_context>

<pallas_src>
import jax
import jax.numpy as jnp
from jax.experimental import pallas as pl
from jax.experimental.pallas import tpu as pltpu

LANES = 128
BIAS_ROWS = 16          # bf16 sublane-tile aligned bias sections
OUT_LANES = 8           # output padded to 8 lanes (T <= 8)


def _round_up(x, m):
    return (x + m - 1) // m * m


def _cdiv(a, b):
    return (a + b - 1) // b


def build_regression_forward(channels, f_num, vocabs, num_targets, *, block_b=512):
    """Returns (pack_params, forward) for a fused encoder+MLP regression model."""
    C = channels
    Ch = channels // 2
    T = num_targets
    f_cat = len(vocabs)
    total_cols = f_num + f_cat          # F = number of table columns (mean divisor)
    v_total = sum(vocabs)

    assert C <= LANES and Ch <= LANES, "channels must fit 128 lanes"
    assert T <= OUT_LANES, "num_targets must fit the 8-lane output"
    assert v_total <= LANES, "total categorical vocab must fit 128 lanes"
    # TODO(synk): for vocab totals > 128, replace multi-hot matmul with a DMA/take gather.

    # merged input width: numerical cols, then offset-added categorical codes (as f32)
    in_cols = max(_round_up(f_num + f_cat, 16), 16)

    # --- packed parameter buffer row layout (every section 16-row aligned, bf16) ---
    r_linw = 0                      # [in_cols, 128]  LinearEncoder weight / F (cat lanes zero)
    r_emb = r_linw + in_cols        # [128, 128]      stacked embedding tables / F
    r_benc = r_emb + LANES          # [16, 128]       sum of LinearEncoder biases / F
    r_w1 = r_benc + BIAS_ROWS       # [128, 128]      hidden1 weight (zero padded)
    r_b1 = r_w1 + LANES             # [16, 128]       hidden1 bias
    r_w2 = r_b1 + BIAS_ROWS         # [128, 128]      hidden2 weight
    r_b2 = r_w2 + LANES             # [16, 128]       hidden2 bias
    r_wh = r_b2 + BIAS_ROWS         # [128, 128]      stacked output-head weights
    r_bh = r_wh + LANES             # [16, 128]       stacked output-head biases
    n_rows = r_bh + BIAS_ROWS

    vocab_offsets = []
    off = 0
    for v in vocabs:
        vocab_offsets.append(off)
        off += v
    vocab_offsets = tuple(vocab_offsets)

    # ------------------------- parameter packing (host/XLA) -------------------------
    def pack_params(lin_w, lin_b, emb_tables, w1, b1, w2, b2, w_heads, b_heads):
        inv_f = 1.0 / float(total_cols)   # mean-pool folded into the encoder params

        def pad2(a, rows):
            a = jnp.asarray(a, jnp.float32)
            return jnp.pad(a, ((0, rows - a.shape[0]), (0, LANES - a.shape[1])))

        emb_all = jnp.concatenate([jnp.asarray(t, jnp.float32) for t in emb_tables], axis=0)
        sections = [
            pad2(jnp.asarray(lin_w, jnp.float32) * inv_f, in_cols),
            pad2(emb_all * inv_f, LANES),
            pad2((jnp.sum(jnp.asarray(lin_b, jnp.float32), axis=0) * inv_f)[None, :], BIAS_ROWS),
            pad2(w1, LANES),
            pad2(jnp.asarray(b1)[None, :], BIAS_ROWS),
            pad2(w2, LANES),
            pad2(jnp.asarray(b2)[None, :], BIAS_ROWS),
            pad2(w_heads, LANES),
            pad2(jnp.asarray(b_heads)[None, :], BIAS_ROWS),
        ]
        # single lane-dense bf16 buffer → one params DMA (~148 KB)
        return jnp.concatenate(sections, axis=0).astype(jnp.bfloat16)

    # ----------------------------------- kernel -----------------------------------
    def kernel(x_ref, p_ref, o_ref):
        x = x_ref[...]                      # [bb, in_cols] f32 (num cols + offset cat codes)
        bb = x.shape[0]

        # multi-hot categorical encoding: one lane per vocab entry (all tables packed).
        # vocab offsets were pre-added in the wrapper, so ranges are disjoint → OR.
        lane = jax.lax.broadcasted_iota(jnp.int32, (bb, LANES), 1)
        hot = jnp.zeros((bb, LANES), jnp.bool_)
        for j in range(f_cat):              # static unroll, f_cat is tiny
            code_j = x[:, f_num + j:f_num + j + 1].astype(jnp.int32)
            hot = jnp.logical_or(hot, lane == code_j)
        mh = jnp.where(hot, 1.0, 0.0).astype(jnp.bfloat16)

        xb = x.astype(jnp.bfloat16)         # cat-code lanes hit zero weight rows

        # fused StypeWise encoder + mean pool over columns (1/F pre-folded, bf16 MXU)
        pooled = (
            jnp.dot(xb, p_ref[r_linw:r_linw + in_cols, :],
                    preferred_element_type=jnp.float32)
            + jnp.dot(mh, p_ref[r_emb:r_emb + LANES, :],
                      preferred_element_type=jnp.float32)
            + p_ref[r_benc:r_benc + 1, :].astype(jnp.float32)
        )                                                           # [bb, 128] f32

        # hidden1 + ReLU
        h1 = jnp.maximum(
            jnp.dot(pooled.astype(jnp.bfloat16), p_ref[r_w1:r_w1 + LANES, :],
                    preferred_element_type=jnp.float32)
            + p_ref[r_b1:r_b1 + 1, :].astype(jnp.float32), 0.0)

        # TODO(synk): Dropout(p=0.15) is identity (eval mode); training needs
        # pltpu.prng_seed / prng_random_bits masking + 1/(1-p) scaling.

        # hidden2 + ReLU
        h2 = jnp.maximum(
            jnp.dot(h1.astype(jnp.bfloat16), p_ref[r_w2:r_w2 + LANES, :],
                    preferred_element_type=jnp.float32)
            + p_ref[r_b2:r_b2 + 1, :].astype(jnp.float32), 0.0)

        # all output heads in one matmul; only the first OUT_LANES columns are stored
        heads = (
            jnp.dot(h2.astype(jnp.bfloat16), p_ref[r_wh:r_wh + LANES, :],
                    preferred_element_type=jnp.float32)
            + p_ref[r_bh:r_bh + 1, :].astype(jnp.float32))
        o_ref[...] = heads[:, :OUT_LANES]

    # ---------------------------------- wrapper ----------------------------------
    def forward(x_num, x_cat, packed_params):
        B = x_num.shape[0]

        # bb: >=2 grid blocks whenever the batch allows (v7x 2 TCs + pipelining),
        # and sized to minimize batch padding for awkward batch sizes.
        if B >= 16:
            n_blocks = max(2, _cdiv(B, block_b))
        else:
            n_blocks = 1
        bb = _round_up(_cdiv(B, n_blocks), 8)
        Bp = _round_up(B, bb)

        x_num = jnp.asarray(x_num, jnp.float32)
        if f_cat:
            codes = (jnp.asarray(x_cat, jnp.int32)
                     + jnp.asarray(vocab_offsets, jnp.int32)[None, :])
            combined = jnp.concatenate([x_num, codes.astype(jnp.float32)], axis=1)
        else:
            combined = x_num
        combined = jnp.pad(
            combined, ((0, Bp - B), (0, in_cols - combined.shape[1])))

        out = pl.pallas_call(
            kernel,
            out_shape=jax.ShapeDtypeStruct((Bp, OUT_LANES), jnp.float32),
            grid_spec=pltpu.PrefetchScalarGridSpec(
                num_scalar_prefetch=0,
                grid=(Bp // bb,),
                in_specs=[
                    pl.BlockSpec((bb, in_cols), lambda i: (i, 0)),
                    pl.BlockSpec((n_rows, LANES), lambda i: (0, 0)),  # params resident
                ],
                out_specs=pl.BlockSpec((bb, OUT_LANES), lambda i: (i, 0)),
            ),
            compiler_params=pltpu.CompilerParams(
                dimension_semantics=("parallel",)),   # v7x: split batch grid over 2 TCs
        )(combined, packed_params)
        return out[:B, :T]

    return pack_params, forward


# ------------------------------------- main -------------------------------------
if __name__ == "__main__":
    key = jax.random.PRNGKey(0)

    B = 8            # batch
    C = 32           # channels
    F_NUM = 3        # numerical columns
    VOCABS = (5, 7)  # categories per categorical column
    F_CAT = len(VOCABS)
    TARGETS = ["target_a", "target_b"]
    T = len(TARGETS)

    keys = jax.random.split(key, 12)

    # ---- inputs (TensorFrame surrogate) ----
    x_num = jax.random.normal(keys[0], (B, F_NUM), dtype=jnp.float32)
    x_cat = jnp.stack(
        [jax.random.randint(keys[1 + j], (B,), 0, VOCABS[j]) for j in range(F_CAT)],
        axis=1).astype(jnp.int32)

    # ---- encoder parameters ----
    lin_w = jax.random.normal(keys[3], (F_NUM, C), dtype=jnp.float32) * 0.1
    lin_b = jax.random.normal(keys[4], (F_NUM, C), dtype=jnp.float32) * 0.1
    emb_tables = [
        jax.random.normal(keys[5 + j], (VOCABS[j], C), dtype=jnp.float32) * 0.1
        for j in range(F_CAT)
    ]

    # ---- MLP parameters (Linear stores weight [out, in]; we use [in, out]) ----
    w1 = jax.random.normal(keys[7], (C, C), dtype=jnp.float32) / jnp.sqrt(C)
    b1 = jax.random.normal(keys[8], (C,), dtype=jnp.float32) * 0.01
    w2 = jax.random.normal(keys[9], (C, C // 2), dtype=jnp.float32) / jnp.sqrt(C)
    b2 = jax.random.normal(keys[10], (C // 2,), dtype=jnp.float32) * 0.01
    w_heads = jax.random.normal(keys[11], (C // 2, T), dtype=jnp.float32) / jnp.sqrt(C // 2)
    b_heads = jnp.arange(T, dtype=jnp.float32) * 0.01

    # ---- build + run fused kernel ----
    pack_params, forward = build_regression_forward(C, F_NUM, VOCABS, T)
    params = pack_params(lin_w, lin_b, emb_tables, w1, b1, w2, b2, w_heads, b_heads)

    out = forward(x_num, x_cat, params)        # [B, T]
    out = jax.block_until_ready(out)

    # dict of per-target predictions, each shape [B] (squeeze(-1) semantics)
    outputs = {name: out[:, i] for i, name in enumerate(TARGETS)}

    # ---- plain-JAX reference (original per-column encoder + mean pool + MLP) ----
    num_enc = x_num[:, :, None] * lin_w[None, :, :] + lin_b[None, :, :]
    cat_enc = jnp.stack([emb_tables[j][x_cat[:, j]] for j in range(F_CAT)], axis=1)
    x_enc = jnp.concatenate([num_enc, cat_enc], axis=1)
    pooled_ref = x_enc.mean(axis=1)
    h1_ref = jax.nn.relu(pooled_ref @ w1 + b1)
    h2_ref = jax.nn.relu(h1_ref @ w2 + b2)
    out_ref = h2_ref @ w_heads + b_heads

    # bf16 matmul operands → loosened tolerance vs the f32 reference (expected).
    assert jnp.allclose(out, out_ref, atol=5e-2, rtol=5e-2)
    assert all(outputs[n].shape == (B,) for n in TARGETS)

    print("KERNEL_OK")
</pallas_src>

<mosaic_0001>
module attributes {stable_mosaic.version = 11 : i64} {
  func.func @kernel(%arg0: i32, %arg1: memref<8x16xf32, #tpu.memory_space<vmem>>, %arg2: memref<592x128xbf16, #tpu.memory_space<vmem>>, %arg3: memref<8x8xf32, #tpu.memory_space<vmem>>) attributes {dimension_semantics = [#tpu.dimension_semantics<parallel>], iteration_bounds = array<i64: 1>, scalar_prefetch = 0 : i64, scratch_operands = 0 : i64, tpu.core_type = #tpu.core_type<tc>, window_params = [{transform_indices = @transform_0, window_bounds = array<i64: 8, 16>}, {pipeline_mode = #tpu.pipeline_mode<synchronous>, transform_indices = @transform_1, window_bounds = array<i64: 592, 128>}, {transform_indices = @transform_2, window_bounds = array<i64: 8, 8>}]} {
    %c0 = arith.constant 0 : index
    %c0_0 = arith.constant 0 : index
    %0 = vector.load %arg1[%c0, %c0_0] : memref<8x16xf32, #tpu.memory_space<vmem>>, vector<8x16xf32>
    %1 = tpu.iota {dimensions = array<i32: 1>} : vector<8x128xi32>
    %false = arith.constant false
    %2 = vector.broadcast %false : i1 to vector<8x128xi1>
    %3 = vector.extract_strided_slice %0 {offsets = [0, 3], sizes = [8, 1], strides = [1, 1]} : vector<8x16xf32> to vector<8x1xf32>
    %4 = arith.fptosi %3 : vector<8x1xf32> to vector<8x1xi32>
    %5 = vector.broadcast %4 : vector<8x1xi32> to vector<8x128xi32>
    %6 = arith.cmpi eq, %1, %5 : vector<8x128xi32>
    %7 = arith.ori %2, %6 : vector<8x128xi1>
    %8 = vector.extract_strided_slice %0 {offsets = [0, 4], sizes = [8, 1], strides = [1, 1]} : vector<8x16xf32> to vector<8x1xf32>
    %9 = arith.fptosi %8 : vector<8x1xf32> to vector<8x1xi32>
    %10 = vector.broadcast %9 : vector<8x1xi32> to vector<8x128xi32>
    %11 = arith.cmpi eq, %1, %10 : vector<8x128xi32>
    %12 = arith.ori %7, %11 : vector<8x128xi1>
    %cst = arith.constant 1.000000e+00 : f32
    %cst_1 = arith.constant 0.000000e+00 : f32
    %13 = vector.broadcast %cst : f32 to vector<8x128xf32>
    %14 = vector.broadcast %cst_1 : f32 to vector<8x128xf32>
    %15 = arith.select %12, %13, %14 : vector<8x128xi1>, vector<8x128xf32>
    %16 = arith.truncf %15 : vector<8x128xf32> to vector<8x128xbf16>
    %17 = arith.truncf %0 : vector<8x16xf32> to vector<8x16xbf16>
    %c0_2 = arith.constant 0 : index
    %c0_3 = arith.constant 0 : index
    %18 = vector.load %arg2[%c0_2, %c0_3] : memref<592x128xbf16, #tpu.memory_space<vmem>>, vector<16x128xbf16>
    %cst_4 = arith.constant dense<0.000000e+00> : vector<8x128xf32>
    %19 = tpu.matmul %17, %18, %cst_4 {dimension_numbers = #tpu.dot_dimension_numbers<[1], [0], [0], [1], [0, 0, 1, 1], [], []>} : vector<8x16xbf16>, vector<16x128xbf16>, vector<8x128xf32> -> vector<8x128xf32>
    %c16 = arith.constant 16 : index
    %c0_5 = arith.constant 0 : index
    %20 = vector.load %arg2[%c16, %c0_5] : memref<592x128xbf16, #tpu.memory_space<vmem>>, vector<128x128xbf16>
    %cst_6 = arith.constant dense<0.000000e+00> : vector<8x128xf32>
    %21 = tpu.matmul %16, %20, %cst_6 {dimension_numbers = #tpu.dot_dimension_numbers<[1], [0], [0], [1], [0, 0, 1, 1], [], []>} : vector<8x128xbf16>, vector<128x128xbf16>, vector<8x128xf32> -> vector<8x128xf32>
    %22 = arith.addf %19, %21 : vector<8x128xf32>
    %c144 = arith.constant 144 : index
    %c0_7 = arith.constant 0 : index
    %23 = vector.load %arg2[%c144, %c0_7] : memref<592x128xbf16, #tpu.memory_space<vmem>>, vector<1x128xbf16>
    %24 = arith.extf %23 : vector<1x128xbf16> to vector<1x128xf32>
    %25 = vector.broadcast %24 : vector<1x128xf32> to vector<8x128xf32>
    %26 = arith.addf %22, %25 : vector<8x128xf32>
    %27 = arith.truncf %26 : vector<8x128xf32> to vector<8x128xbf16>
    %c160 = arith.constant 160 : index
    %c0_8 = arith.constant 0 : index
    %28 = vector.load %arg2[%c160, %c0_8] : memref<592x128xbf16, #tpu.memory_space<vmem>>, vector<128x128xbf16>
    %cst_9 = arith.constant dense<0.000000e+00> : vector<8x128xf32>
    %29 = tpu.matmul %27, %28, %cst_9 {dimension_numbers = #tpu.dot_dimension_numbers<[1], [0], [0], [1], [0, 0, 1, 1], [], []>} : vector<8x128xbf16>, vector<128x128xbf16>, vector<8x128xf32> -> vector<8x128xf32>
    %c288 = arith.constant 288 : index
    %c0_10 = arith.constant 0 : index
    %30 = vector.load %arg2[%c288, %c0_10] : memref<592x128xbf16, #tpu.memory_space<vmem>>, vector<1x128xbf16>
    %31 = arith.extf %30 : vector<1x128xbf16> to vector<1x128xf32>
    %32 = vector.broadcast %31 : vector<1x128xf32> to vector<8x128xf32>
    %33 = arith.addf %29, %32 : vector<8x128xf32>
    %cst_11 = arith.constant 0.000000e+00 : f32
    %34 = vector.broadcast %cst_11 : f32 to vector<8x128xf32>
    %35 = arith.maximumf %33, %34 : vector<8x128xf32>
    %36 = arith.truncf %35 : vector<8x128xf32> to vector<8x128xbf16>
    %c304 = arith.constant 304 : index
    %c0_12 = arith.constant 0 : index
    %37 = vector.load %arg2[%c304, %c0_12] : memref<592x128xbf16, #tpu.memory_space<vmem>>, vector<128x128xbf16>
    %cst_13 = arith.constant dense<0.000000e+00> : vector<8x128xf32>
    %38 = tpu.matmul %36, %37, %cst_13 {dimension_numbers = #tpu.dot_dimension_numbers<[1], [0], [0], [1], [0, 0, 1, 1], [], []>} : vector<8x128xbf16>, vector<128x128xbf16>, vector<8x128xf32> -> vector<8x128xf32>
    %c432 = arith.constant 432 : index
    %c0_14 = arith.constant 0 : index
    %39 = vector.load %arg2[%c432, %c0_14] : memref<592x128xbf16, #tpu.memory_space<vmem>>, vector<1x128xbf16>
    %40 = arith.extf %39 : vector<1x128xbf16> to vector<1x128xf32>
    %41 = vector.broadcast %40 : vector<1x128xf32> to vector<8x128xf32>
    %42 = arith.addf %38, %41 : vector<8x128xf32>
    %cst_15 = arith.constant 0.000000e+00 : f32
    %43 = vector.broadcast %cst_15 : f32 to vector<8x128xf32>
    %44 = arith.maximumf %42, %43 : vector<8x128xf32>
    %45 = arith.truncf %44 : vector<8x128xf32> to vector<8x128xbf16>
    %c448 = arith.constant 448 : index
    %c0_16 = arith.constant 0 : index
    %46 = vector.load %arg2[%c448, %c0_16] : memref<592x128xbf16, #tpu.memory_space<vmem>>, vector<128x128xbf16>
    %cst_17 = arith.constant dense<0.000000e+00> : vector<8x128xf32>
    %47 = tpu.matmul %45, %46, %cst_17 {dimension_numbers = #tpu.dot_dimension_numbers<[1], [0], [0], [1], [0, 0, 1, 1], [], []>} : vector<8x128xbf16>, vector<128x128xbf16>, vector<8x128xf32> -> vector<8x128xf32>
    %c576 = arith.constant 576 : index
    %c0_18 = arith.constant 0 : index
    %48 = vector.load %arg2[%c576, %c0_18] : memref<592x128xbf16, #tpu.memory_space<vmem>>, vector<1x128xbf16>
    %49 = arith.extf %48 : vector<1x128xbf16> to vector<1x128xf32>
    %50 = vector.broadcast %49 : vector<1x128xf32> to vector<8x128xf32>
    %51 = arith.addf %47, %50 : vector<8x128xf32>
    %52 = vector.extract_strided_slice %51 {offsets = [0, 0], sizes = [8, 8], strides = [1, 1]} : vector<8x128xf32> to vector<8x8xf32>
    %c0_19 = arith.constant 0 : index
    %c0_20 = arith.constant 0 : index
    %53 = vector.load %arg3[%c0_19, %c0_20] : memref<8x8xf32, #tpu.memory_space<vmem>>, vector<8x8xf32>
    tpu.vector_store %arg3[%c0_19, %c0_20], %52 {strides = array<i32>} : memref<8x8xf32, #tpu.memory_space<vmem>>, vector<8x8xf32>,
    return
  }
  func.func @transform_0(%arg0: i32) -> (i32, i32) {
    %c0_i32 = arith.constant 0 : i32
    %c0_i32_0 = arith.constant 0 : i32
    return %arg0, %c0_i32 : i32, i32
  }
  func.func @transform_1(%arg0: i32) -> (i32, i32) {
    %c0_i32 = arith.constant 0 : i32
    %c0_i32_0 = arith.constant 0 : i32
    %c0_i32_1 = arith.constant 0 : i32
    return %c0_i32, %c0_i32_0 : i32, i32
  }
  func.func @transform_2(%arg0: i32) -> (i32, i32) {
    %c0_i32 = arith.constant 0 : i32
    %c0_i32_0 = arith.constant 0 : i32
    return %arg0, %c0_i32 : i32, i32
  }
}

</mosaic_0001>

<llo_original>
// kernel: tpu_custom_call.1
$region0: #{tpu_custom_call.1}
  #allocation0 [shape = 'u32[]', space=smem, size = 0x4, offset = 0x4, fixed_abs, tag = 'smem constant byte address 0x4 - core index']
  #allocation1 [shape = 'u32[72,128]{1,0:T(1,128)}', space=vmem, size = 0x9000, scoped, tag = 'internal scratch']
  %s0 = inlined_call_operand.hbm [shape: f32[8,16], index: 0, kind: input, shape index: {}]
  %s1 = inlined_call_operand.hbm [shape: bf16[592,128], index: 1, kind: input, shape index: {}]
  %s2 = inlined_call_operand.hbm [shape: f32[8,8], index: 2, kind: output, shape index: {}]
  %s3 = sld [smem:[#allocation0]]
  $region26: #{tpu_custom_call.1} parent=0
    _
  %s5 = ssub.s32 1, %s3
  %s6 = scalar_select 0, %s5, %s3
  $region1: #{tpu_custom_call.1} parent=0
    #allocation2 [shape = 'u8[4096]{0}', space=vmem, size = 0x1000, scoped, tag = 'input window, operand 0, single buffered']
    #allocation3 [shape = 's32[1]{0}', space=sflag, size = 0x4, scoped, tag = 'scoped memory for tpu_custom_call.1']
    #allocation4 [shape = 's32[1]{0}', space=sflag, size = 0x4, scoped, tag = 'scoped memory for tpu_custom_call.1']
    #allocation5 [shape = 'u8[151552]{0}', space=vmem, size = 0x25000, scoped, tag = 'input window, operand 1, single buffered']
    #allocation6 [shape = 's32[1]{0}', space=sflag, size = 0x4, scoped, tag = 'scoped memory for tpu_custom_call.1']
    #allocation7 [shape = 'u8[4096]{0}', space=vmem, size = 0x1000, scoped, tag = 'output window, operand 0, single buffered']
    %7 = vsyncpa [#allocation3], 0
    %8 = vsyncpa [#allocation6], 0
    %9 = vsyncpa [#allocation4], 0
    // Predicated region
    $region2: #{tpu_custom_call.1} parent=1 // pred_check
      _
    $region3: #{tpu_custom_call.1} parent=1 // pred_check_branch
      %11 = sbr.rel (0) target = $region5
    $region4: #{tpu_custom_call.1} parent=1 // pred_region
      %13 = vsyncadd [#allocation3], 0
      %s15 = sshll.u32 %s0, 4
      %s16 = int_to_ptr.hbm [resolvable:$true] %s15
      %s17 = sshll.u32 [#allocation2], 4
      %s18 = int_to_ptr.vmem [resolvable:$true] %s17
      %20 = dma.hbm_to_vmem [thread:$0]  %s16, 128, %s18, [#allocation3]
    $region5: #{tpu_custom_call.1} parent=1 // pred_fallthru
      _
    // Predicated region
    $region6: #{tpu_custom_call.1} parent=1 // pred_check
      _
    $region7: #{tpu_custom_call.1} parent=1 // pred_check_branch
      %22 = sbr.rel (0) target = $region9
    $region8: #{tpu_custom_call.1} parent=1 // pred_region
      %24 = vsyncadd [#allocation6], 0
      %s25 = sshll.u32 %s1, 4
      %s26 = int_to_ptr.hbm [resolvable:$true] %s25
      %s27 = sshll.u32 [#allocation5], 4
      %s28 = int_to_ptr.vmem [resolvable:$true] %s27
      %33 = dma.hbm_to_vmem [thread:$0]  %s26, 4736, %s28, [#allocation6], 64, 64, 4
    $region9: #{tpu_custom_call.1} parent=1 // pred_fallthru
      _
    // Predicated region
    $region10: #{tpu_custom_call.1} parent=1 // pred_check
      _
    $region11: #{tpu_custom_call.1} parent=1 // pred_check_branch
      %35 = sbr.rel (0) target = $region13
    $region12: #{tpu_custom_call.1} parent=1 // pred_region
      %37 = dma.done [#allocation3], 128
    $region13: #{tpu_custom_call.1} parent=1 // pred_fallthru
      _
    // Predicated region
    $region14: #{tpu_custom_call.1} parent=1 // pred_check
      _
    $region15: #{tpu_custom_call.1} parent=1 // pred_check_branch
      %39 = sbr.rel (0) target = $region17
    $region16: #{tpu_custom_call.1} parent=1 // pred_region
      %41 = dma.done [#allocation6], 4736
    $region17: #{tpu_custom_call.1} parent=1 // pred_fallthru
      _
    %v43 = vld [vmem:[#allocation2] sm:$0xff]
    %v44 = vlaneseq
    %v45 = vand.u32 %v44, 127
    %v46 = vcvt.f32.s32.to.zero.pseudo %v43
    %47 = vset.pattern.permute.xlu0 3
    %48 = vperm.xlu0 %47, %v46
    %v49 = vpop.permute.xlu0 %48
    %vm50 = vcmp.eq.s32.totalorder %v45, %v49
    %51 = vset.pattern.permute.xlu0 4
    %52 = vperm.xlu0 %51, %v46
    %v53 = vpop.permute.xlu0 %52
    %vm54 = vcmp.eq.s32.totalorder %v45, %v53
    %vm55 = vmor %vm50, %vm54
    %v56 = vsel %vm55, 1.0, 0.0
    %v57 = vpack.c.bf16 %v56, %v56
    %v58 = vpack.c.bf16 %v43, %v43
    %v59 = vld [vmem:[#allocation5] sm:$0xf]
    %v60 = vld [vmem:[#allocation5 + $0x4] sm:$0xf]
    %v61 = vld [vmem:[#allocation5 + $0x8] sm:$0xf]
    %v62 = vld [vmem:[#allocation5 + $0xc] sm:$0xf]
    %v63 = vld [vmem:[#allocation5 + $0x10] sm:$0xf]
    %v64 = vld [vmem:[#allocation5 + $0x14] sm:$0xf]
    %v65 = vld [vmem:[#allocation5 + $0x18] sm:$0xf]
    %v66 = vld [vmem:[#allocation5 + $0x1c] sm:$0xf]
    %v67 = vld [vmem:[#allocation5 + $0x20] sm:$0xf]
    %v68 = vld [vmem:[#allocation5 + $0x24] sm:$0xf]
    %v69 = vld [vmem:[#allocation5 + $0x28] sm:$0xf]
    %v70 = vld [vmem:[#allocation5 + $0x2c] sm:$0xf]
    %v71 = vld [vmem:[#allocation5 + $0x30] sm:$0xf]
    %v72 = vld [vmem:[#allocation5 + $0x34] sm:$0xf]
    %v73 = vld [vmem:[#allocation5 + $0x38] sm:$0xf]
    %v74 = vld [vmem:[#allocation5 + $0x3c] sm:$0xf]
    %v75 = vld [vmem:[#allocation5 + $0x40] sm:$0xf]
    %v76 = vld [vmem:[#allocation5 + $0x44] sm:$0xf]
    %v93 = vunpack.c.l.b16 %v61
    %v94 = vunpack.c.l.b16 %v62
    %v95 = vunpack.c.l.b16 %v63
    %v96 = vunpack.c.l.b16 %v64
    %v97 = vunpack.c.l.b16 %v65
    %v98 = vunpack.c.l.b16 %v66
    %v99 = vunpack.c.l.b16 %v67
    %v100 = vunpack.c.l.b16 %v68
    %v101 = vunpack.c.l.b16 %v69
    %v102 = vunpack.c.l.b16 %v70
    %v103 = vunpack.c.l.b16 %v71
    %v104 = vunpack.c.l.b16 %v72
    %v105 = vunpack.c.l.b16 %v73
    %v106 = vunpack.c.l.b16 %v74
    %v107 = vunpack.c.l.b16 %v75
    %v108 = vunpack.c.l.b16 %v76
    %v109 = vpack.c.b16 %v94, %v93
    %v110 = vpack.c.b16 %v96, %v95
    %v111 = vpack.c.b16 %v98, %v97
    %v112 = vpack.c.b16 %v100, %v99
    %v113 = vpack.c.b16 %v102, %v101
    %v114 = vpack.c.b16 %v104, %v103
    %v115 = vpack.c.b16 %v106, %v105
    %v116 = vpack.c.b16 %v108, %v107
    %125 = vmatpush.bf16.msra.mxu0 %v116
    %126 = vmatpush.bf16.msra.mxu0 %v115
    %127 = vmatpush.bf16.msra.mxu0 %v114
    %128 = vmatpush.bf16.msra.mxu0 %v113
    %129 = vmatpush.bf16.msra.mxu0 %v112
    %130 = vmatpush.bf16.msra.mxu0 %v111
    %131 = vmatpush.bf16.msra.mxu0 %v110
    %132 = vmatpush.bf16.msra.mxu0 %v109
    %133 = vmatmul.bf16.gmra.mxu0 %v57
    %v134 = vpop.f32.mrf.mxu0
    %v135 = vadd.f32 0.0, %v134
    %v136 = vpop.f32.mrf.mxu0
    %137 = vdwg.mxu0
    %v140 = vunpack.c.l.b16 %v59
    %v141 = vunpack.c.l.b16 %v60
    %v142 = vpack.c.b16 %v141, %v140
    %vm144 = vcmask 130048
    %v146 = vsel %vm144, %v58, 0
    %148 = vmatpush.bf16.msra.mxu0 0
    %149 = vmatpush.bf16.msra.mxu0 0
    %150 = vmatpush.bf16.msra.mxu0 0
    %151 = vmatpush.bf16.msra.mxu0 0
    %152 = vmatpush.bf16.msra.mxu0 0
    %153 = vmatpush.bf16.msra.mxu0 0
    %154 = vmatpush.bf16.msra.mxu0 0
    %155 = vmatpush.bf16.msra.mxu0 %v142
    %156 = vmatmul.bf16.gmra.mxu0 %v146
    %v157 = vpop.f32.mrf.mxu0
    %v158 = vadd.f32 %v135, %v157
    %v159 = vpop.f32.mrf.mxu0
    %160 = vdwg.mxu0
    %v161 = vld [vmem:[#allocation5 + $0x48] sm:$0x1]
    %v162 = vunpack.c.l.bf16 %v161
    %v163 = vperm.slane %v162, 0
    %v164 = vadd.f32 %v158, %v163
    %v165 = vpack.c.bf16 %v164, %v164
    %v166 = vld [vmem:[#allocation5 + $0x50] sm:$0xf]
    %v167 = vld [vmem:[#allocation5 + $0x54] sm:$0xf]
    %v168 = vld [vmem:[#allocation5 + $0x58] sm:$0xf]
    %v169 = vld [vmem:[#allocation5 + $0x5c] sm:$0xf]
    %v170 = vld [vmem:[#allocation5 + $0x60] sm:$0xf]
    %v171 = vld [vmem:[#allocation5 + $0x64] sm:$0xf]
    %v172 = vld [vmem:[#allocation5 + $0x68] sm:$0xf]
    %v173 = vld [vmem:[#allocation5 + $0x6c] sm:$0xf]
    %v174 = vld [vmem:[#allocation5 + $0x70] sm:$0xf]
    %v175 = vld [vmem:[#allocation5 + $0x74] sm:$0xf]
    %v176 = vld [vmem:[#allocation5 + $0x78] sm:$0xf]
    %v177 = vld [vmem:[#allocation5 + $0x7c] sm:$0xf]
    %v178 = vld [vmem:[#allocation5 + $0x80] sm:$0xf]
    %v179 = vld [vmem:[#allocation5 + $0x84] sm:$0xf]
    %v180 = vld [vmem:[#allocation5 + $0x88] sm:$0xf]
    %v181 = vld [vmem:[#allocation5 + $0x8c] sm:$0xf]
    %v182 = vld [vmem:[#allocation5 + $0x90] sm:$0x1]
    %v183 = vunpack.c.l.bf16 %v182
    %v184 = vperm.slane %v183, 0
    %v201 = vunpack.c.l.b16 %v166
    %v202 = vunpack.c.l.b16 %v167
    %v203 = vunpack.c.l.b16 %v168
    %v204 = vunpack.c.l.b16 %v169
    %v205 = vunpack.c.l.b16 %v170
    %v206 = vunpack.c.l.b16 %v171
    %v207 = vunpack.c.l.b16 %v172
    %v208 = vunpack.c.l.b16 %v173
    %v209 = vunpack.c.l.b16 %v174
    %v210 = vunpack.c.l.b16 %v175
    %v211 = vunpack.c.l.b16 %v176
    %v212 = vunpack.c.l.b16 %v177
    %v213 = vunpack.c.l.b16 %v178
    %v214 = vunpack.c.l.b16 %v179
    %v215 = vunpack.c.l.b16 %v180
    %v216 = vunpack.c.l.b16 %v181
    %v217 = vpack.c.b16 %v202, %v201
    %v218 = vpack.c.b16 %v204, %v203
    %v219 = vpack.c.b16 %v206, %v205
    %v220 = vpack.c.b16 %v208, %v207
    %v221 = vpack.c.b16 %v210, %v209
    %v222 = vpack.c.b16 %v212, %v211
    %v223 = vpack.c.b16 %v214, %v213
    %v224 = vpack.c.b16 %v216, %v215
    %233 = vmatpush.bf16.msra.mxu0 %v224
    %234 = vmatpush.bf16.msra.mxu0 %v223
    %235 = vmatpush.bf16.msra.mxu0 %v222
    %236 = vmatpush.bf16.msra.mxu0 %v221
    %237 = vmatpush.bf16.msra.mxu0 %v220
    %238 = vmatpush.bf16.msra.mxu0 %v219
    %239 = vmatpush.bf16.msra.mxu0 %v218
    %240 = vmatpush.bf16.msra.mxu0 %v217
    %241 = vmatmul.bf16.gmra.mxu0 %v165
    %v242 = vpop.f32.mrf.mxu0
    %v243 = vadd.f32 %v184, %v242
    %v244 = vpop.f32.mrf.mxu0
    %245 = vdwg.mxu0
    %v246 = vmax.f32 %v243, 0.0
    %v247 = vpack.c.bf16 %v246, %v246
    %v248 = vld [vmem:[#allocation5 + $0x98] sm:$0xf]
    %v249 = vld [vmem:[#allocation5 + $0x9c] sm:$0xf]
    %v250 = vld [vmem:[#allocation5 + $0xa0] sm:$0xf]
    %v251 = vld [vmem:[#allocation5 + $0xa4] sm:$0xf]
    %v252 = vld [vmem:[#allocation5 + $0xa8] sm:$0xf]
    %v253 = vld [vmem:[#allocation5 + $0xac] sm:$0xf]
    %v254 = vld [vmem:[#allocation5 + $0xb0] sm:$0xf]
    %v255 = vld [vmem:[#allocation5 + $0xb4] sm:$0xf]
    %v256 = vld [vmem:[#allocation5 + $0xb8] sm:$0xf]
    %v257 = vld [vmem:[#allocation5 + $0xbc] sm:$0xf]
    %v258 = vld [vmem:[#allocation5 + $0xc0] sm:$0xf]
    %v259 = vld [vmem:[#allocation5 + $0xc4] sm:$0xf]
    %v260 = vld [vmem:[#allocation5 + $0xc8] sm:$0xf]
    %v261 = vld [vmem:[#allocation5 + $0xcc] sm:$0xf]
    %v262 = vld [vmem:[#allocation5 + $0xd0] sm:$0xf]
    %v263 = vld [vmem:[#allocation5 + $0xd4] sm:$0xf]
    %v264 = vld [vmem:[#allocation5 + $0xd8] sm:$0x1]
    %v265 = vunpack.c.l.bf16 %v264
    %v266 = vperm.slane %v265, 0
    %v283 = vunpack.c.l.b16 %v248
    %v284 = vunpack.c.l.b16 %v249
    %v285 = vunpack.c.l.b16 %v250
    %v286 = vunpack.c.l.b16 %v251
    %v287 = vunpack.c.l.b16 %v252
    %v288 = vunpack.c.l.b16 %v253
    %v289 = vunpack.c.l.b16 %v254
    %v290 = vunpack.c.l.b16 %v255
    %v291 = vunpack.c.l.b16 %v256
    %v292 = vunpack.c.l.b16 %v257
    %v293 = vunpack.c.l.b16 %v258
    %v294 = vunpack.c.l.b16 %v259
    %v295 = vunpack.c.l.b16 %v260
    %v296 = vunpack.c.l.b16 %v261
    %v297 = vunpack.c.l.b16 %v262
    %v298 = vunpack.c.l.b16 %v263
    %v299 = vpack.c.b16 %v284, %v283
    %v300 = vpack.c.b16 %v286, %v285
    %v301 = vpack.c.b16 %v288, %v287
    %v302 = vpack.c.b16 %v290, %v289
    %v303 = vpack.c.b16 %v292, %v291
    %v304 = vpack.c.b16 %v294, %v293
    %v305 = vpack.c.b16 %v296, %v295
    %v306 = vpack.c.b16 %v298, %v297
    %315 = vmatpush.bf16.msra.mxu0 %v306
    %316 = vmatpush.bf16.msra.mxu0 %v305
    %317 = vmatpush.bf16.msra.mxu0 %v304
    %318 = vmatpush.bf16.msra.mxu0 %v303
    %319 = vmatpush.bf16.msra.mxu0 %v302
    %320 = vmatpush.bf16.msra.mxu0 %v301
    %321 = vmatpush.bf16.msra.mxu0 %v300
    %322 = vmatpush.bf16.msra.mxu0 %v299
    %323 = vmatmul.bf16.gmra.mxu0 %v247
    %v324 = vpop.f32.mrf.mxu0
    %v325 = vadd.f32 %v266, %v324
    %v326 = vpop.f32.mrf.mxu0
    %327 = vdwg.mxu0
    %v328 = vmax.f32 %v325, 0.0
    %v329 = vpack.c.bf16 %v328, %v328
    %v330 = vld [vmem:[#allocation5 + $0xe0] sm:$0xf]
    %v331 = vld [vmem:[#allocation5 + $0xe4] sm:$0xf]
    %v332 = vld [vmem:[#allocation5 + $0xe8] sm:$0xf]
    %v333 = vld [vmem:[#allocation5 + $0xec] sm:$0xf]
    %v334 = vld [vmem:[#allocation5 + $0xf0] sm:$0xf]
    %v335 = vld [vmem:[#allocation5 + $0xf4] sm:$0xf]
    %v336 = vld [vmem:[#allocation5 + $0xf8] sm:$0xf]
    %v337 = vld [vmem:[#allocation5 + $0xfc] sm:$0xf]
    %v338 = vld [vmem:[#allocation5 + $0x100] sm:$0xf]
    %v339 = vld [vmem:[#allocation5 + $0x104] sm:$0xf]
    %v340 = vld [vmem:[#allocation5 + $0x108] sm:$0xf]
    %v341 = vld [vmem:[#allocation5 + $0x10c] sm:$0xf]
    %v342 = vld [vmem:[#allocation5 + $0x110] sm:$0xf]
    %v343 = vld [vmem:[#allocation5 + $0x114] sm:$0xf]
    %v344 = vld [vmem:[#allocation5 + $0x118] sm:$0xf]
    %v345 = vld [vmem:[#allocation5 + $0x11c] sm:$0xf]
    %v346 = vld [vmem:[#allocation5 + $0x120] sm:$0x1]
    %v347 = vunpack.c.l.bf16 %v346
    %v348 = vperm.slane %v347, 0
    %v365 = vunpack.c.l.b16 %v330
    %v366 = vunpack.c.l.b16 %v331
    %v367 = vunpack.c.l.b16 %v332
    %v368 = vunpack.c.l.b16 %v333
    %v369 = vunpack.c.l.b16 %v334
    %v370 = vunpack.c.l.b16 %v335
    %v371 = vunpack.c.l.b16 %v336
    %v372 = vunpack.c.l.b16 %v337
    %v373 = vunpack.c.l.b16 %v338
    %v374 = vunpack.c.l.b16 %v339
    %v375 = vunpack.c.l.b16 %v340
    %v376 = vunpack.c.l.b16 %v341
    %v377 = vunpack.c.l.b16 %v342
    %v378 = vunpack.c.l.b16 %v343
    %v379 = vunpack.c.l.b16 %v344
    %v380 = vunpack.c.l.b16 %v345
    %v381 = vpack.c.b16 %v366, %v365
    %v382 = vpack.c.b16 %v368, %v367
    %v383 = vpack.c.b16 %v370, %v369
    %v384 = vpack.c.b16 %v372, %v371
    %v385 = vpack.c.b16 %v374, %v373
    %v386 = vpack.c.b16 %v376, %v375
    %v387 = vpack.c.b16 %v378, %v377
    %v388 = vpack.c.b16 %v380, %v379
    %397 = vmatpush.bf16.msra.mxu0 %v388
    %398 = vmatpush.bf16.msra.mxu0 %v387
    %399 = vmatpush.bf16.msra.mxu0 %v386
    %400 = vmatpush.bf16.msra.mxu0 %v385
    %401 = vmatpush.bf16.msra.mxu0 %v384
    %402 = vmatpush.bf16.msra.mxu0 %v383
    %403 = vmatpush.bf16.msra.mxu0 %v382
    %404 = vmatpush.bf16.msra.mxu0 %v381
    %405 = vmatmul.bf16.gmra.mxu0 %v329
    %v406 = vpop.f32.mrf.mxu0
    %v407 = vadd.f32 %v348, %v406
    %v408 = vpop.f32.mrf.mxu0
    %409 = vdwg.mxu0
    %vm410 = vcmask 64512
    %411 = vst.msk [vmem:[#allocation7] sm:$0xff] %vm410, %v407
    // Predicated region
    $region18: #{tpu_custom_call.1} parent=1 // pred_check
      _
    $region19: #{tpu_custom_call.1} parent=1 // pred_check_branch
      %413 = sbr.rel (0) target = $region21
    $region20: #{tpu_custom_call.1} parent=1 // pred_region
      %415 = vsyncadd [#allocation4], 0
      %s417 = sshll.u32 [#allocation7], 4
      %s418 = int_to_ptr.vmem [resolvable:$true] %s417
      %s419 = sshll.u32 %s2, 4
      %s420 = int_to_ptr.hbm [resolvable:$true] %s419
      %422 = dma.vmem_to_hbm [thread:$0]  %s418, 128, %s420, [#allocation4]
    $region21: #{tpu_custom_call.1} parent=1 // pred_fallthru
      _
    // Predicated region
    $region22: #{tpu_custom_call.1} parent=1 // pred_check
      _
    $region23: #{tpu_custom_call.1} parent=1 // pred_check_branch
      %424 = sbr.rel (0) target = $region25
    $region24: #{tpu_custom_call.1} parent=1 // pred_region
      %426 = dma.done [#allocation4], 128
    $region25: #{tpu_custom_call.1} parent=1 // pred_fallthru
      _
    %427 = vsyncpa [#allocation3], 1
    %428 = vsyncpa [#allocation6], 1
    %429 = vsyncpa [#allocation4], 1

</llo_original>
